<compile_context>
chip_gen: v6e
topology: v6e:2x2x1
jax: 0.10.0
libtpu: 0.0.40
codegen_flags: <defaults>
</compile_context>

<pallas_src>
import jax
import jax.numpy as jnp
from jax.experimental import pallas as pl
from jax.experimental.pallas import tpu as pltpu

# ----------------------------- problem sizes -----------------------------
STATE_DIM = 16   # dimension of the physical state x
HIDDEN = 32      # hidden width of encoder / decoder MLPs
LATENT = 16      # Koopman latent dimension

# Packed 128-lane output layout: [ h2_pre(unused) | y | y_plus | x_plus | 0 ]
PACK_W = 128
H2_OFF = 0
Y_OFF = HIDDEN                      # 32
YP_OFF = HIDDEN + LATENT            # 48
XP_OFF = HIDDEN + 2 * LATENT        # 64
assert XP_OFF + STATE_DIM <= PACK_W

# Weight slab row layout: [ we1(16 rows) | W2(128 rows) | W3(128 rows) ]
W1_ROW0 = 0
W2_ROW0 = STATE_DIM                 # 16  (multiple of 8)
W3_ROW0 = STATE_DIM + PACK_W        # 144 (multiple of 8)
W_ROWS = STATE_DIM + 2 * PACK_W     # 272 (multiple of 8)
B_ROWS = 8


# ------------------------------- kernel ---------------------------------
def koopman_kernel(x_ref, w_ref, b_ref, out_ref):
    # x_ref:   [tb, STATE_DIM]
    # w_ref:   [W_ROWS, 128]   packed, lane-placed, zero-padded weights
    # b_ref:   [8, 128]        rows 0/1/2 = layer-1 / fused-middle / decoder biases
    # out_ref: [tb, 128]       packed output slab (one dense store)
    x = x_ref[...]

    w1 = w_ref[W1_ROW0:W1_ROW0 + STATE_DIM, :]     # [16, 128]
    w2 = w_ref[W2_ROW0:W2_ROW0 + PACK_W, :]        # [128, 128]
    w3 = w_ref[W3_ROW0:W3_ROW0 + PACK_W, :]        # [128, 128]
    b1 = b_ref[0:1, :]
    b2 = b_ref[1:2, :]
    b3 = b_ref[2:3, :]

    # encoder layer 1 (lanes 0:32 useful, 32:128 exact zeros)
    h = jnp.maximum(jnp.dot(x, w1, preferred_element_type=jnp.float32) + b1, 0.0)

    # fused middle pass: one MXU op yields [h2_pre | y | y_plus | 0]
    cat = jnp.dot(h, w2, preferred_element_type=jnp.float32) + b2

    # decoder: ReLU over the whole tile is safe because w3 rows 32:128 are zero,
    # so only relu(h2_pre) (lanes 0:32) contributes to the final matmul.
    h2 = jnp.maximum(cat, 0.0)
    xp = jnp.dot(h2, w3, preferred_element_type=jnp.float32) + b3   # x_plus at 64:80

    # single dense 128-lane store
    out_ref[...] = cat + xp


# --------------------------- parameter packing ---------------------------
def pack_params(params):
    """One-time algebraic folds + lane/row placement into two slabs."""
    f32 = jnp.float32
    we1, be1 = params["we1"], params["be1"]          # [16,32], [1,32]
    we2, be2 = params["we2"], params["be2"]          # [32,16], [1,16]
    wd1, bd1 = params["wd1"], params["bd1"]          # [16,32], [1,32]
    wd2, bd2 = params["wd2"], params["bd2"]          # [32,16], [1,16]

    M = params["A"] + params["B"]                    # [16,16]
    MW = M @ wd1                                     # [16,32]

    # layer-1 block (rows 0:16): we1 in lanes 0:HIDDEN
    w1 = jnp.zeros((STATE_DIM, PACK_W), f32).at[:, 0:HIDDEN].set(we1)
    b1 = jnp.zeros((1, PACK_W), f32).at[:, 0:HIDDEN].set(be1)

    # fused middle block (rows 0:HIDDEN useful; rows HIDDEN:128 zero)
    w2 = (jnp.zeros((PACK_W, PACK_W), f32)
          .at[0:HIDDEN, H2_OFF:H2_OFF + HIDDEN].set(we2 @ MW)        # -> h2_pre
          .at[0:HIDDEN, Y_OFF:Y_OFF + LATENT].set(we2)               # -> y
          .at[0:HIDDEN, YP_OFF:YP_OFF + LATENT].set(we2 @ M))        # -> y_plus
    b2 = (jnp.zeros((1, PACK_W), f32)
          .at[:, H2_OFF:H2_OFF + HIDDEN].set(be2 @ MW + bd1)
          .at[:, Y_OFF:Y_OFF + LATENT].set(be2)
          .at[:, YP_OFF:YP_OFF + LATENT].set(be2 @ M))

    # final decoder block (rows 0:HIDDEN useful, x_plus placed at lanes 64:80)
    w3 = jnp.zeros((PACK_W, PACK_W), f32).at[0:HIDDEN, XP_OFF:XP_OFF + STATE_DIM].set(wd2)
    b3 = jnp.zeros((1, PACK_W), f32).at[:, XP_OFF:XP_OFF + STATE_DIM].set(bd2)

    wslab = jnp.concatenate([w1, w2, w3], axis=0)                    # [272, 128]
    bslab = jnp.concatenate([b1, b2, b3, jnp.zeros((B_ROWS - 3, PACK_W), f32)], axis=0)
    return wslab, bslab


def _default_num_tiles():
    # 1 grid step on single-TC chips (v5e/v6e); 2 parallel tiles on dual-TC v7x.
    try:
        kind = jax.devices()[0].device_kind.lower()
        if "v7" in kind:
            return 2
    except Exception:
        pass
    return 1


# ------------------------------- wrapper ---------------------------------
def combined_deep_koopman(x, params, *, tb=None, num_tiles=None, return_packed=False):
    """Fused CombinedDeepKoopman forward.

    x: [B, STATE_DIM] float32.  Returns (y, y_plus, x_plus), or the packed
    [B, 128] slab when return_packed=True (lanes 32:48=y, 48:64=y_plus, 64:80=x_plus).
    """
    B = x.shape[0]
    assert x.shape[1] == STATE_DIM

    if tb is None:
        if num_tiles is None:
            num_tiles = _default_num_tiles()
        num_tiles = max(1, min(int(num_tiles), pl.cdiv(B, 8)))
        tb = pl.cdiv(B, num_tiles)
    tb = max(8, ((int(tb) + 7) // 8) * 8)   # multiple-of-8 sublane tile
    tb = min(tb, 2048)                      # VMEM-safe on every generation (incl. v7x 64 MiB)

    b_pad = pl.cdiv(B, tb) * tb
    if b_pad != B:
        x = jnp.pad(x, ((0, b_pad - B), (0, 0)))
    grid = (b_pad // tb,)

    wslab, bslab = pack_params(params)

    packed = pl.pallas_call(
        koopman_kernel,
        out_shape=jax.ShapeDtypeStruct((b_pad, PACK_W), jnp.float32),
        grid_spec=pltpu.PrefetchScalarGridSpec(
            num_scalar_prefetch=0,
            grid=grid,
            in_specs=[
                pl.BlockSpec((tb, STATE_DIM), lambda i: (i, 0)),     # x tile
                pl.BlockSpec((W_ROWS, PACK_W), lambda i: (0, 0)),    # weight slab (grid-invariant)
                pl.BlockSpec((B_ROWS, PACK_W), lambda i: (0, 0)),    # bias slab (grid-invariant)
            ],
            out_specs=pl.BlockSpec((tb, PACK_W), lambda i: (i, 0)),
        ),
        compiler_params=pltpu.CompilerParams(
            dimension_semantics=("parallel",),   # batch tiles are independent
        ),
    )(x, wslab, bslab)

    if return_packed:
        return packed[:B]
    y = packed[:B, Y_OFF:Y_OFF + LATENT]
    y_plus = packed[:B, YP_OFF:YP_OFF + LATENT]
    x_plus = packed[:B, XP_OFF:XP_OFF + STATE_DIM]
    return y, y_plus, x_plus


# --------------------------- deterministic init ---------------------------
def init_params(key):
    ks = jax.random.split(key, 8)

    def lin(k, fan_in, fan_out):
        # Stored as [in, out] (pre-transposed PyTorch Linear weight).
        scale = 1.0 / jnp.sqrt(fan_in)
        return jax.random.uniform(k, (fan_in, fan_out), jnp.float32, -scale, scale)

    return {
        "we1": lin(ks[0], STATE_DIM, HIDDEN),
        "be1": jnp.zeros((1, HIDDEN), jnp.float32),
        "we2": lin(ks[1], HIDDEN, LATENT),
        "be2": jnp.zeros((1, LATENT), jnp.float32),
        "A": lin(ks[2], LATENT, LATENT),
        "B": lin(ks[3], LATENT, LATENT),
        "wd1": lin(ks[4], LATENT, HIDDEN),
        "bd1": jnp.zeros((1, HIDDEN), jnp.float32),
        "wd2": lin(ks[5], HIDDEN, STATE_DIM),
        "bd2": jnp.zeros((1, STATE_DIM), jnp.float32),
    }


# --------------------------- pure-JAX reference ---------------------------
def reference_forward(x, p):
    # Original (unfused) formulation, exactly matching the PyTorch module.
    h = jnp.maximum(x @ p["we1"] + p["be1"], 0.0)
    y = h @ p["we2"] + p["be2"]
    y_plus = y @ p["A"] + y @ p["B"]
    h2 = jnp.maximum(y_plus @ p["wd1"] + p["bd1"], 0.0)
    x_plus = h2 @ p["wd2"] + p["bd2"]
    return y, y_plus, x_plus


if __name__ == "__main__":
    key = jax.random.PRNGKey(0)
    k_x, k_p = jax.random.split(key)

    BATCH = 8   # small example batch (one grid step; tile is a multiple of 8 rows)
    x = jax.random.normal(k_x, (BATCH, STATE_DIM), jnp.float32)
    params = init_params(k_p)

    y, y_plus, x_plus = combined_deep_koopman(x, params)
    jax.block_until_ready((y, y_plus, x_plus))

    # correctness check against the pure-JAX (original-formula) reference
    y_r, yp_r, xp_r = reference_forward(x, params)
    assert jnp.allclose(y, y_r, atol=1e-4, rtol=1e-4)
    assert jnp.allclose(y_plus, yp_r, atol=1e-4, rtol=1e-4)
    assert jnp.allclose(x_plus, xp_r, atol=1e-4, rtol=1e-4)

    print("KERNEL_OK")
</pallas_src>

<mosaic_0001>
module attributes {stable_mosaic.version = 11 : i64} {
  func.func @koopman_kernel(%arg0: i32, %arg1: memref<8x16xf32, #tpu.memory_space<vmem>>, %arg2: memref<272x128xf32, #tpu.memory_space<vmem>>, %arg3: memref<8x128xf32, #tpu.memory_space<vmem>>, %arg4: memref<8x128xf32, #tpu.memory_space<vmem>>) attributes {dimension_semantics = [#tpu.dimension_semantics<parallel>], iteration_bounds = array<i64: 1>, scalar_prefetch = 0 : i64, scratch_operands = 0 : i64, tpu.core_type = #tpu.core_type<tc>, window_params = [{transform_indices = @transform_0, window_bounds = array<i64: 8, 16>}, {pipeline_mode = #tpu.pipeline_mode<synchronous>, transform_indices = @transform_1, window_bounds = array<i64: 272, 128>}, {pipeline_mode = #tpu.pipeline_mode<synchronous>, transform_indices = @transform_2, window_bounds = array<i64: 8, 128>}, {transform_indices = @transform_3, window_bounds = array<i64: 8, 128>}]} {
    %c0 = arith.constant 0 : index
    %c0_0 = arith.constant 0 : index
    %0 = vector.load %arg1[%c0, %c0_0] : memref<8x16xf32, #tpu.memory_space<vmem>>, vector<8x16xf32>
    %c0_1 = arith.constant 0 : index
    %c0_2 = arith.constant 0 : index
    %1 = vector.load %arg2[%c0_1, %c0_2] : memref<272x128xf32, #tpu.memory_space<vmem>>, vector<16x128xf32>
    %c16 = arith.constant 16 : index
    %c0_3 = arith.constant 0 : index
    %2 = vector.load %arg2[%c16, %c0_3] : memref<272x128xf32, #tpu.memory_space<vmem>>, vector<128x128xf32>
    %c144 = arith.constant 144 : index
    %c0_4 = arith.constant 0 : index
    %3 = vector.load %arg2[%c144, %c0_4] : memref<272x128xf32, #tpu.memory_space<vmem>>, vector<128x128xf32>
    %c0_5 = arith.constant 0 : index
    %c0_6 = arith.constant 0 : index
    %4 = vector.load %arg3[%c0_5, %c0_6] : memref<8x128xf32, #tpu.memory_space<vmem>>, vector<1x128xf32>
    %c1 = arith.constant 1 : index
    %c0_7 = arith.constant 0 : index
    %5 = vector.load %arg3[%c1, %c0_7] : memref<8x128xf32, #tpu.memory_space<vmem>>, vector<1x128xf32>
    %c2 = arith.constant 2 : index
    %c0_8 = arith.constant 0 : index
    %6 = vector.load %arg3[%c2, %c0_8] : memref<8x128xf32, #tpu.memory_space<vmem>>, vector<1x128xf32>
    %cst = arith.constant dense<0.000000e+00> : vector<8x128xf32>
    %7 = tpu.matmul %0, %1, %cst {dimension_numbers = #tpu.dot_dimension_numbers<[1], [0], [0], [1], [0, 0, 1, 1], [], []>} : vector<8x16xf32>, vector<16x128xf32>, vector<8x128xf32> -> vector<8x128xf32>
    %8 = vector.broadcast %4 : vector<1x128xf32> to vector<8x128xf32>
    %9 = arith.addf %7, %8 : vector<8x128xf32>
    %cst_9 = arith.constant 0.000000e+00 : f32
    %10 = vector.broadcast %cst_9 : f32 to vector<8x128xf32>
    %11 = arith.maximumf %9, %10 : vector<8x128xf32>
    %cst_10 = arith.constant dense<0.000000e+00> : vector<8x128xf32>
    %12 = tpu.matmul %11, %2, %cst_10 {dimension_numbers = #tpu.dot_dimension_numbers<[1], [0], [0], [1], [0, 0, 1, 1], [], []>} : vector<8x128xf32>, vector<128x128xf32>, vector<8x128xf32> -> vector<8x128xf32>
    %13 = vector.broadcast %5 : vector<1x128xf32> to vector<8x128xf32>
    %14 = arith.addf %12, %13 : vector<8x128xf32>
    %cst_11 = arith.constant 0.000000e+00 : f32
    %15 = vector.broadcast %cst_11 : f32 to vector<8x128xf32>
    %16 = arith.maximumf %14, %15 : vector<8x128xf32>
    %cst_12 = arith.constant dense<0.000000e+00> : vector<8x128xf32>
    %17 = tpu.matmul %16, %3, %cst_12 {dimension_numbers = #tpu.dot_dimension_numbers<[1], [0], [0], [1], [0, 0, 1, 1], [], []>} : vector<8x128xf32>, vector<128x128xf32>, vector<8x128xf32> -> vector<8x128xf32>
    %18 = vector.broadcast %6 : vector<1x128xf32> to vector<8x128xf32>
    %19 = arith.addf %17, %18 : vector<8x128xf32>
    %20 = arith.addf %14, %19 : vector<8x128xf32>
    %c0_13 = arith.constant 0 : index
    %c0_14 = arith.constant 0 : index
    %21 = vector.load %arg4[%c0_13, %c0_14] : memref<8x128xf32, #tpu.memory_space<vmem>>, vector<8x128xf32>
    tpu.vector_store %arg4[%c0_13, %c0_14], %20 {strides = array<i32>} : memref<8x128xf32, #tpu.memory_space<vmem>>, vector<8x128xf32>,
    return
  }
  func.func @transform_0(%arg0: i32) -> (i32, i32) {
    %c0_i32 = arith.constant 0 : i32
    %c0_i32_0 = arith.constant 0 : i32
    return %arg0, %c0_i32 : i32, i32
  }
  func.func @transform_1(%arg0: i32) -> (i32, i32) {
    %c0_i32 = arith.constant 0 : i32
    %c0_i32_0 = arith.constant 0 : i32
    %c0_i32_1 = arith.constant 0 : i32
    return %c0_i32, %c0_i32_0 : i32, i32
  }
  func.func @transform_2(%arg0: i32) -> (i32, i32) {
    %c0_i32 = arith.constant 0 : i32
    %c0_i32_0 = arith.constant 0 : i32
    %c0_i32_1 = arith.constant 0 : i32
    return %c0_i32, %c0_i32_0 : i32, i32
  }
  func.func @transform_3(%arg0: i32) -> (i32, i32) {
    %c0_i32 = arith.constant 0 : i32
    %c0_i32_0 = arith.constant 0 : i32
    return %arg0, %c0_i32 : i32, i32
  }
}

</mosaic_0001>

<llo_original>
// kernel: tpu_custom_call.1
$region0: #{tpu_custom_call.1}
  #allocation0 [shape = 'u32[]', space=smem, size = 0x4, offset = 0x4, fixed_abs, tag = 'smem constant byte address 0x4 - core index']
  #allocation1 [shape = 'u32[144,128]{1,0:T(1,128)}', space=vmem, size = 0x12000, scoped, tag = 'internal scratch']
  %s0 = inlined_call_operand.hbm [shape: f32[8,16], index: 0, kind: input, shape index: {}]
  %s1 = inlined_call_operand.hbm [shape: f32[272,128], index: 1, kind: input, shape index: {}]
  %s2 = inlined_call_operand.hbm [shape: f32[8,128], index: 2, kind: input, shape index: {}]
  %s3 = inlined_call_operand.hbm [shape: f32[8,128], index: 3, kind: output, shape index: {}]
  %s4 = sld [smem:[#allocation0]]
  $region34: #{tpu_custom_call.1} parent=0
    _
  %s6 = ssub.s32 1, %s4
  %s7 = scalar_select 0, %s6, %s4
  $region1: #{tpu_custom_call.1} parent=0
    #allocation2 [shape = 'u8[4096]{0}', space=vmem, size = 0x1000, scoped, tag = 'input window, operand 0, single buffered']
    #allocation3 [shape = 's32[1]{0}', space=sflag, size = 0x4, scoped, tag = 'scoped memory for tpu_custom_call.1']
    #allocation4 [shape = 's32[1]{0}', space=sflag, size = 0x4, scoped, tag = 'scoped memory for tpu_custom_call.1']
    #allocation5 [shape = 'u8[139264]{0}', space=vmem, size = 0x22000, scoped, tag = 'input window, operand 1, single buffered']
    #allocation6 [shape = 's32[1]{0}', space=sflag, size = 0x4, scoped, tag = 'scoped memory for tpu_custom_call.1']
    #allocation7 [shape = 'u8[4096]{0}', space=vmem, size = 0x1000, scoped, tag = 'input window, operand 2, single buffered']
    #allocation8 [shape = 'u8[4096]{0}', space=vmem, size = 0x1000, scoped, tag = 'output window, operand 0, single buffered']
    %8 = vsyncpa [#allocation3], 0
    %9 = vsyncpa [#allocation6], 0
    %10 = vsyncpa [#allocation4], 0
    // Predicated region
    $region2: #{tpu_custom_call.1} parent=1 // pred_check
      _
    $region3: #{tpu_custom_call.1} parent=1 // pred_check_branch
      %12 = sbr.rel (0) target = $region5
    $region4: #{tpu_custom_call.1} parent=1 // pred_region
      %s14 = ssub.s32 128, 128
      %15 = vsyncadd [#allocation3], %s14
      %s17 = sshll.u32 [#allocation2], 4
      %s18 = int_to_ptr.vmem [resolvable:$true] %s17
      %20 = dma.hbm_to_vmem [thread:$0]  %s0, 128, %s18, [#allocation3]
    $region5: #{tpu_custom_call.1} parent=1 // pred_fallthru
      _
    // Predicated region
    $region6: #{tpu_custom_call.1} parent=1 // pred_check
      _
    $region7: #{tpu_custom_call.1} parent=1 // pred_check_branch
      %22 = sbr.rel (0) target = $region9
    $region8: #{tpu_custom_call.1} parent=1 // pred_region
      %s24 = ssub.s32 4352, 4352
      %25 = vsyncadd [#allocation6], %s24
      %s26 = sshll.u32 [#allocation5], 4
      %s27 = int_to_ptr.vmem [resolvable:$true] %s26
      %32 = dma.hbm_to_vmem [thread:$0]  %s1, 4352, %s27, [#allocation6], 128, 128, 8
    $region9: #{tpu_custom_call.1} parent=1 // pred_fallthru
      _
    // Predicated region
    $region10: #{tpu_custom_call.1} parent=1 // pred_check
      _
    $region11: #{tpu_custom_call.1} parent=1 // pred_check_branch
      %34 = sbr.rel (0) target = $region13
    $region12: #{tpu_custom_call.1} parent=1 // pred_region
      %s36 = ssub.s32 128, 128
      %37 = vsyncadd [#allocation6], %s36
      %s39 = sshll.u32 [#allocation7], 4
      %s40 = int_to_ptr.vmem [resolvable:$true] %s39
      %42 = dma.hbm_to_vmem [thread:$0]  %s2, 128, %s40, [#allocation6]
    $region13: #{tpu_custom_call.1} parent=1 // pred_fallthru
      _
    // Predicated region
    $region14: #{tpu_custom_call.1} parent=1 // pred_check
      _
    $region15: #{tpu_custom_call.1} parent=1 // pred_check_branch
      %44 = sbr.rel (0) target = $region17
    $region16: #{tpu_custom_call.1} parent=1 // pred_region
      %45 = dma.done [#allocation3], 128
    $region17: #{tpu_custom_call.1} parent=1 // pred_fallthru
      _
    // Predicated region
    $region18: #{tpu_custom_call.1} parent=1 // pred_check
      _
    $region19: #{tpu_custom_call.1} parent=1 // pred_check_branch
      %47 = sbr.rel (0) target = $region21
    $region20: #{tpu_custom_call.1} parent=1 // pred_region
      %48 = dma.done [#allocation6], 4352
    $region21: #{tpu_custom_call.1} parent=1 // pred_fallthru
      _
    // Predicated region
    $region22: #{tpu_custom_call.1} parent=1 // pred_check
      _
    $region23: #{tpu_custom_call.1} parent=1 // pred_check_branch
      %50 = sbr.rel (0) target = $region25
    $region24: #{tpu_custom_call.1} parent=1 // pred_region
      %51 = dma.done [#allocation6], 128
    $region25: #{tpu_custom_call.1} parent=1 // pred_fallthru
      _
    %v52 = vld [vmem:[#allocation2] sm:$0xff]
    %v53 = vld [vmem:[#allocation5] sm:$0xff]
    %v54 = vld [vmem:[#allocation5 + $0x8] sm:$0xff]
    %v55 = vld [vmem:[#allocation5 + $0x10] sm:$0xff]
    %v56 = vld [vmem:[#allocation5 + $0x18] sm:$0xff]
    %v57 = vld [vmem:[#allocation5 + $0x20] sm:$0xff]
    %v58 = vld [vmem:[#allocation5 + $0x28] sm:$0xff]
    %v59 = vld [vmem:[#allocation5 + $0x30] sm:$0xff]
    %v60 = vld [vmem:[#allocation5 + $0x38] sm:$0xff]
    %v61 = vld [vmem:[#allocation5 + $0x40] sm:$0xff]
    %v62 = vld [vmem:[#allocation5 + $0x48] sm:$0xff]
    %v63 = vld [vmem:[#allocation5 + $0x50] sm:$0xff]
    %v64 = vld [vmem:[#allocation5 + $0x58] sm:$0xff]
    %v65 = vld [vmem:[#allocation5 + $0x60] sm:$0xff]
    %v66 = vld [vmem:[#allocation5 + $0x68] sm:$0xff]
    %v67 = vld [vmem:[#allocation5 + $0x70] sm:$0xff]
    %v68 = vld [vmem:[#allocation5 + $0x78] sm:$0xff]
    %v69 = vld [vmem:[#allocation5 + $0x80] sm:$0xff]
    %v70 = vld [vmem:[#allocation5 + $0x88] sm:$0xff]
    %v71 = vld [vmem:[#allocation5 + $0x90] sm:$0xff]
    %v72 = vld [vmem:[#allocation5 + $0x98] sm:$0xff]
    %v73 = vld [vmem:[#allocation5 + $0xa0] sm:$0xff]
    %v74 = vld [vmem:[#allocation5 + $0xa8] sm:$0xff]
    %v75 = vld [vmem:[#allocation5 + $0xb0] sm:$0xff]
    %v76 = vld [vmem:[#allocation5 + $0xb8] sm:$0xff]
    %v77 = vld [vmem:[#allocation5 + $0xc0] sm:$0xff]
    %v78 = vld [vmem:[#allocation5 + $0xc8] sm:$0xff]
    %v79 = vld [vmem:[#allocation5 + $0xd0] sm:$0xff]
    %v80 = vld [vmem:[#allocation5 + $0xd8] sm:$0xff]
    %v81 = vld [vmem:[#allocation5 + $0xe0] sm:$0xff]
    %v82 = vld [vmem:[#allocation5 + $0xe8] sm:$0xff]
    %v83 = vld [vmem:[#allocation5 + $0xf0] sm:$0xff]
    %v84 = vld [vmem:[#allocation5 + $0xf8] sm:$0xff]
    %v85 = vld [vmem:[#allocation5 + $0x100] sm:$0xff]
    %v86 = vld [vmem:[#allocation5 + $0x108] sm:$0xff]
    %v87 = vld [vmem:[#allocation7] sm:$0x1]
    %v88 = vld [vmem:[#allocation7 + $0x1] sm:$0x1]
    %v89 = vld [vmem:[#allocation7 + $0x2] sm:$0x1]
    %v90 = vlaneseq
    %v91 = vshrl.u32 %v90, 7
    %v92 = vsub.s32 0, %v91
    %v93 = vrot.slane %v87, %v92
    %vm94 = vcmask 130048
    %v96 = vsel %vm94, %v52, 0
    %98 = vmatprep.subr.mxu0 0.0
    %99 = vmatpush1.msra.mxu0 0.0
    %100 = vmatprep.subr.mxu0 0.0
    %101 = vmatpush1.msra.mxu0 0.0
    %102 = vmatprep.subr.mxu0 0.0
    %103 = vmatpush1.msra.mxu0 0.0
    %104 = vmatprep.subr.mxu0 0.0
    %105 = vmatpush1.msra.mxu0 0.0
    %106 = vmatprep.subr.mxu0 0.0
    %107 = vmatpush1.msra.mxu0 0.0
    %108 = vmatprep.subr.mxu0 0.0
    %109 = vmatpush1.msra.mxu0 0.0
    %110 = vmatprep.subr.mxu0 0.0
    %111 = vmatpush1.msra.mxu0 0.0
    %112 = vmatprep.subr.mxu0 0.0
    %113 = vmatpush1.msra.mxu0 0.0
    %114 = vmatprep.subr.mxu0 0.0
    %115 = vmatpush1.msra.mxu0 0.0
    %116 = vmatprep.subr.mxu0 0.0
    %117 = vmatpush1.msra.mxu0 0.0
    %118 = vmatprep.subr.mxu0 0.0
    %119 = vmatpush1.msra.mxu0 0.0
    %120 = vmatprep.subr.mxu0 0.0
    %121 = vmatpush1.msra.mxu0 0.0
    %122 = vmatprep.subr.mxu0 0.0
    %123 = vmatpush1.msra.mxu0 0.0
    %124 = vmatprep.subr.mxu0 0.0
    %125 = vmatpush1.msra.mxu0 0.0
    %126 = vmatprep.subr.mxu0 0.0
    %127 = vmatpush1.msra.mxu0 %v54
    %128 = vmatprep.subr.mxu0 0.0
    %129 = vmatpush1.msra.mxu0 %v53
    %130 = vmatprep.subr.mxu0 0.0
    %131 = vmatpush2.msra.mxu0 0.0
    %132 = vmatprep.subr.mxu0 0.0
    %133 = vmatpush2.msra.mxu0 0.0
    %134 = vmatprep.subr.mxu0 0.0
    %135 = vmatpush2.msra.mxu0 0.0
    %136 = vmatprep.subr.mxu0 0.0
    %137 = vmatpush2.msra.mxu0 0.0
    %138 = vmatprep.subr.mxu0 0.0
    %139 = vmatpush2.msra.mxu0 0.0
    %140 = vmatprep.subr.mxu0 0.0
    %141 = vmatpush2.msra.mxu0 0.0
    %142 = vmatprep.subr.mxu0 0.0
    %143 = vmatpush2.msra.mxu0 0.0
    %144 = vmatprep.subr.mxu0 0.0
    %145 = vmatpush2.msra.mxu0 0.0
    %146 = vmatprep.subr.mxu0 0.0
    %147 = vmatpush2.msra.mxu0 0.0
    %148 = vmatprep.subr.mxu0 0.0
    %149 = vmatpush2.msra.mxu0 0.0
    %150 = vmatprep.subr.mxu0 0.0
    %151 = vmatpush2.msra.mxu0 0.0
    %152 = vmatprep.subr.mxu0 0.0
    %153 = vmatpush2.msra.mxu0 0.0
    %154 = vmatprep.subr.mxu0 0.0
    %155 = vmatpush2.msra.mxu0 0.0
    %156 = vmatprep.subr.mxu0 0.0
    %157 = vmatpush2.msra.mxu0 0.0
    %158 = vmatprep.subr.mxu0 0.0
    %159 = vmatpush2.msra.mxu0 0.0
    %160 = vmatprep.subr.mxu0 0.0
    %161 = vmatpush2.msra.mxu0 0.0
    %162 = vmatprep.mubr.f32.mxu0 0.0
    %163 = vmatmul.mubr.f32.gmra.mxu0 %v96
    %v164 = vpop.f32.mrf.mxu0
    %v165 = vadd.f32 %v93, %v164
    %v166 = vpop.f32.mrf.mxu0
    %167 = vdwg.mxu0
    %v168 = vmax.f32 %v165, 0.0
    %v169 = vlaneseq
    %v170 = vshrl.u32 %v169, 7
    %v171 = vsub.s32 0, %v170
    %v172 = vrot.slane %v88, %v171
    %173 = vmatprep.subr.mxu0 0.0
    %174 = vmatpush1.msra.mxu0 %v70
    %175 = vmatprep.subr.mxu0 0.0
    %176 = vmatpush1.msra.mxu0 %v69
    %177 = vmatprep.subr.mxu0 0.0
    %178 = vmatpush1.msra.mxu0 %v68
    %179 = vmatprep.subr.mxu0 0.0
    %180 = vmatpush1.msra.mxu0 %v67
    %181 = vmatprep.subr.mxu0 0.0
    %182 = vmatpush1.msra.mxu0 %v66
    %183 = vmatprep.subr.mxu0 0.0
    %184 = vmatpush1.msra.mxu0 %v65
    %185 = vmatprep.subr.mxu0 0.0
    %186 = vmatpush1.msra.mxu0 %v64
    %187 = vmatprep.subr.mxu0 0.0
    %188 = vmatpush1.msra.mxu0 %v63
    %189 = vmatprep.subr.mxu0 0.0
    %190 = vmatpush1.msra.mxu0 %v62
    %191 = vmatprep.subr.mxu0 0.0
    %192 = vmatpush1.msra.mxu0 %v61
    %193 = vmatprep.subr.mxu0 0.0
    %194 = vmatpush1.msra.mxu0 %v60
    %195 = vmatprep.subr.mxu0 0.0
    %196 = vmatpush1.msra.mxu0 %v59
    %197 = vmatprep.subr.mxu0 0.0
    %198 = vmatpush1.msra.mxu0 %v58
    %199 = vmatprep.subr.mxu0 0.0
    %200 = vmatpush1.msra.mxu0 %v57
    %201 = vmatprep.subr.mxu0 0.0
    %202 = vmatpush1.msra.mxu0 %v56
    %203 = vmatprep.subr.mxu0 0.0
    %204 = vmatpush1.msra.mxu0 %v55
    %205 = vmatprep.subr.mxu0 0.0
    %206 = vmatpush2.msra.mxu0 0.0
    %207 = vmatprep.subr.mxu0 0.0
    %208 = vmatpush2.msra.mxu0 0.0
    %209 = vmatprep.subr.mxu0 0.0
    %210 = vmatpush2.msra.mxu0 0.0
    %211 = vmatprep.subr.mxu0 0.0
    %212 = vmatpush2.msra.mxu0 0.0
    %213 = vmatprep.subr.mxu0 0.0
    %214 = vmatpush2.msra.mxu0 0.0
    %215 = vmatprep.subr.mxu0 0.0
    %216 = vmatpush2.msra.mxu0 0.0
    %217 = vmatprep.subr.mxu0 0.0
    %218 = vmatpush2.msra.mxu0 0.0
    %219 = vmatprep.subr.mxu0 0.0
    %220 = vmatpush2.msra.mxu0 0.0
    %221 = vmatprep.subr.mxu0 0.0
    %222 = vmatpush2.msra.mxu0 0.0
    %223 = vmatprep.subr.mxu0 0.0
    %224 = vmatpush2.msra.mxu0 0.0
    %225 = vmatprep.subr.mxu0 0.0
    %226 = vmatpush2.msra.mxu0 0.0
    %227 = vmatprep.subr.mxu0 0.0
    %228 = vmatpush2.msra.mxu0 0.0
    %229 = vmatprep.subr.mxu0 0.0
    %230 = vmatpush2.msra.mxu0 0.0
    %231 = vmatprep.subr.mxu0 0.0
    %232 = vmatpush2.msra.mxu0 0.0
    %233 = vmatprep.subr.mxu0 0.0
    %234 = vmatpush2.msra.mxu0 0.0
    %235 = vmatprep.subr.mxu0 0.0
    %236 = vmatpush2.msra.mxu0 0.0
    %237 = vmatprep.mubr.f32.mxu0 0.0
    %238 = vmatmul.mubr.f32.gmra.mxu0 %v168
    %v239 = vpop.f32.mrf.mxu0
    %v240 = vadd.f32 %v172, %v239
    %v241 = vpop.f32.mrf.mxu0
    %242 = vdwg.mxu0
    %v243 = vmax.f32 %v240, 0.0
    %v244 = vlaneseq
    %v245 = vshrl.u32 %v244, 7
    %v246 = vsub.s32 0, %v245
    %v247 = vrot.slane %v89, %v246
    %248 = vmatprep.subr.mxu0 0.0
    %249 = vmatpush1.msra.mxu0 %v86
    %250 = vmatprep.subr.mxu0 0.0
    %251 = vmatpush1.msra.mxu0 %v85
    %252 = vmatprep.subr.mxu0 0.0
    %253 = vmatpush1.msra.mxu0 %v84
    %254 = vmatprep.subr.mxu0 0.0
    %255 = vmatpush1.msra.mxu0 %v83
    %256 = vmatprep.subr.mxu0 0.0
    %257 = vmatpush1.msra.mxu0 %v82
    %258 = vmatprep.subr.mxu0 0.0
    %259 = vmatpush1.msra.mxu0 %v81
    %260 = vmatprep.subr.mxu0 0.0
    %261 = vmatpush1.msra.mxu0 %v80
    %262 = vmatprep.subr.mxu0 0.0
    %263 = vmatpush1.msra.mxu0 %v79
    %264 = vmatprep.subr.mxu0 0.0
    %265 = vmatpush1.msra.mxu0 %v78
    %266 = vmatprep.subr.mxu0 0.0
    %267 = vmatpush1.msra.mxu0 %v77
    %268 = vmatprep.subr.mxu0 0.0
    %269 = vmatpush1.msra.mxu0 %v76
    %270 = vmatprep.subr.mxu0 0.0
    %271 = vmatpush1.msra.mxu0 %v75
    %272 = vmatprep.subr.mxu0 0.0
    %273 = vmatpush1.msra.mxu0 %v74
    %274 = vmatprep.subr.mxu0 0.0
    %275 = vmatpush1.msra.mxu0 %v73
    %276 = vmatprep.subr.mxu0 0.0
    %277 = vmatpush1.msra.mxu0 %v72
    %278 = vmatprep.subr.mxu0 0.0
    %279 = vmatpush1.msra.mxu0 %v71
    %280 = vmatprep.subr.mxu0 0.0
    %281 = vmatpush2.msra.mxu0 0.0
    %282 = vmatprep.subr.mxu0 0.0
    %283 = vmatpush2.msra.mxu0 0.0
    %284 = vmatprep.subr.mxu0 0.0
    %285 = vmatpush2.msra.mxu0 0.0
    %286 = vmatprep.subr.mxu0 0.0
    %287 = vmatpush2.msra.mxu0 0.0
    %288 = vmatprep.subr.mxu0 0.0
    %289 = vmatpush2.msra.mxu0 0.0
    %290 = vmatprep.subr.mxu0 0.0
    %291 = vmatpush2.msra.mxu0 0.0
    %292 = vmatprep.subr.mxu0 0.0
    %293 = vmatpush2.msra.mxu0 0.0
    %294 = vmatprep.subr.mxu0 0.0
    %295 = vmatpush2.msra.mxu0 0.0
    %296 = vmatprep.subr.mxu0 0.0
    %297 = vmatpush2.msra.mxu0 0.0
    %298 = vmatprep.subr.mxu0 0.0
    %299 = vmatpush2.msra.mxu0 0.0
    %300 = vmatprep.subr.mxu0 0.0
    %301 = vmatpush2.msra.mxu0 0.0
    %302 = vmatprep.subr.mxu0 0.0
    %303 = vmatpush2.msra.mxu0 0.0
    %304 = vmatprep.subr.mxu0 0.0
    %305 = vmatpush2.msra.mxu0 0.0
    %306 = vmatprep.subr.mxu0 0.0
    %307 = vmatpush2.msra.mxu0 0.0
    %308 = vmatprep.subr.mxu0 0.0
    %309 = vmatpush2.msra.mxu0 0.0
    %310 = vmatprep.subr.mxu0 0.0
    %311 = vmatpush2.msra.mxu0 0.0
    %312 = vmatprep.mubr.f32.mxu0 0.0
    %313 = vmatmul.mubr.f32.gmra.mxu0 %v243
    %v314 = vpop.f32.mrf.mxu0
    %v315 = vadd.f32 %v247, %v314
    %v316 = vpop.f32.mrf.mxu0
    %317 = vdwg.mxu0
    %v318 = vadd.f32 %v240, %v315
    %319 = vst [vmem:[#allocation8] sm:$0xff] %v318
    // Predicated region
    $region26: #{tpu_custom_call.1} parent=1 // pred_check
      _
    $region27: #{tpu_custom_call.1} parent=1 // pred_check_branch
      %321 = sbr.rel (0) target = $region29
    $region28: #{tpu_custom_call.1} parent=1 // pred_region
      %s323 = ssub.s32 128, 128
      %324 = vsyncadd [#allocation4], %s323
      %s326 = sshll.u32 [#allocation8], 4
      %s327 = int_to_ptr.vmem [resolvable:$true] %s326
      %329 = dma.vmem_to_hbm [thread:$0]  %s327, 128, %s3, [#allocation4]
    $region29: #{tpu_custom_call.1} parent=1 // pred_fallthru
      _
    // Predicated region
    $region30: #{tpu_custom_call.1} parent=1 // pred_check
      _
    $region31: #{tpu_custom_call.1} parent=1 // pred_check_branch
      %331 = sbr.rel (0) target = $region33
    $region32: #{tpu_custom_call.1} parent=1 // pred_region
      %332 = dma.done [#allocation4], 128
    $region33: #{tpu_custom_call.1} parent=1 // pred_fallthru
      _
    %333 = vsyncpa [#allocation3], 1
    %334 = vsyncpa [#allocation6], 1
    %335 = vsyncpa [#allocation4], 1

</llo_original>
